<compile_context>
chip_gen: v6e
topology: v6e:2x2x1
jax: 0.10.0
libtpu: 0.0.40
codegen_flags: <defaults>
</compile_context>

<pallas_src>
import random

import jax
import jax.numpy as jnp
from jax import lax
from jax.experimental import pallas as pl
from jax.experimental.pallas import tpu as pltpu

IGNORE_LABEL = 101


def _round_up(x, m):
    return ((x + m - 1) // m) * m


def sample_paste_position(horizon, image_shape, outlier_shape, rng_seed=0):
    """Same random.randint logic as the PyTorch module (host-side randomness)."""
    _, W, H = image_shape
    _, wo, ho = outlier_shape
    rng = random.Random(rng_seed)
    x_index = rng.randint(min(max(int(horizon), 0), W - wo), W - wo)
    y_index = rng.randint(0, H - ho)
    return x_index, y_index


def _pick_block(dim, requested, align):
    """Requested block if aligned and divides the dim; otherwise full extent."""
    if requested is not None and requested % align == 0 and 0 < requested <= dim \
            and dim % requested == 0:
        return requested
    return dim


def _window(dim, patch, index, blk):
    """Block-aligned, in-bounds window along one axis covering [index, index+patch)."""
    win = min(_round_up(patch, blk) + blk, dim)
    start = min((index // blk) * blk, dim - win)
    return start, win, win // blk


def _blend_kernel(alpha_blend):
    alpha = float(alpha_blend)

    def kernel(offs_ref, img_ref, lab_ref, ood_ref, msk_ref, oimg_ref, olab_ref):
        del offs_ref  # only consumed by the index_maps
        m = msk_ref[...].astype(jnp.float32)            # (BW, BH), 0 outside the patch
        img = img_ref[...].astype(jnp.float32)          # (C, BW, BH)
        ood = ood_ref[...].astype(jnp.float32)          # (C, BW, BH), 0 outside the patch
        # Fused form of  img - alpha*m*img + alpha*ood*m .  Exactly the identity wherever
        # m == 0, so pixels inside the window but outside the patch round-trip bit-exactly
        # through the aliased output buffer.
        out = img + alpha * (m[None, :, :] * (ood - img))
        oimg_ref[...] = out.astype(oimg_ref.dtype)
        # label[patch][mask.bool()] = 101
        olab_ref[...] = jnp.where(
            m != 0.0, jnp.asarray(IGNORE_LABEL, olab_ref.dtype), lab_ref[...])

    return kernel


def outlier_injection(image, label, outlier, mask, horizon,
                      alpha_blend=1.0, histogram_matching=False, blur=0,
                      rng_seed=0, block_w=64, block_h=128):
    """image (C,W,H), label (W,H), outlier (C,wo,ho), mask (wo,ho).  Dtypes preserved."""
    # TODO(synk): histogram_matching (torch.unique / np.interp) and gaussian blur have no
    # clean Pallas equivalent; the module defaults (False / 0) are what is implemented.
    del histogram_matching, blur

    C, W, H = image.shape
    _, wo, ho = outlier.shape

    # --- host-side random paste position (same logic as the PyTorch module) ------------
    x_index, y_index = sample_paste_position(
        horizon, image.shape, outlier.shape, rng_seed)

    # --- 2-D block-aligned window covering the paste rectangle -------------------------
    BW = _pick_block(W, block_w, 8)      # sublane axis
    BH = _pick_block(H, block_h, 128)    # lane axis (keep stores lane-dense)
    x0, WW, n_wblocks = _window(W, wo, x_index, BW)
    y0, HH, n_hblocks = _window(H, ho, y_index, BH)
    dx = x_index - x0                    # 0 <= dx, dx + wo <= WW by construction
    dy = y_index - y0                    # 0 <= dy, dy + ho <= HH by construction

    # --- glue: place outlier/mask into WINDOW-sized (not image-sized) buffers ----------
    ood_win = lax.dynamic_update_slice(
        jnp.zeros((C, WW, HH), image.dtype), outlier.astype(image.dtype),
        (0, dx, dy))
    msk_win = lax.dynamic_update_slice(
        jnp.zeros((WW, HH), mask.dtype), mask, (dx, dy))

    # Runtime block offsets of the window inside the full image (scalar prefetch).
    offs = jnp.array([x0 // BW, y0 // BH], dtype=jnp.int32)

    out_img, out_lab = pl.pallas_call(
        _blend_kernel(alpha_blend),
        out_shape=(jax.ShapeDtypeStruct((C, W, H), image.dtype),
                   jax.ShapeDtypeStruct((W, H), label.dtype)),
        grid_spec=pltpu.PrefetchScalarGridSpec(
            num_scalar_prefetch=1,
            grid=(n_wblocks, n_hblocks),
            in_specs=[
                pl.BlockSpec((C, BW, BH),
                             lambda i, j, off: (0, off[0] + i, off[1] + j)),  # image
                pl.BlockSpec((BW, BH),
                             lambda i, j, off: (off[0] + i, off[1] + j)),     # label
                pl.BlockSpec((C, BW, BH), lambda i, j, off: (0, i, j)),       # outlier win
                pl.BlockSpec((BW, BH), lambda i, j, off: (i, j)),             # mask win
            ],
            out_specs=(
                pl.BlockSpec((C, BW, BH),
                             lambda i, j, off: (0, off[0] + i, off[1] + j)),
                pl.BlockSpec((BW, BH),
                             lambda i, j, off: (off[0] + i, off[1] + j)),
            ),
        ),
        # image -> out_img, label -> out_lab.  Operand indices count the scalar-prefetch
        # operand at position 0.  Blocks outside the window are never written, so the
        # aliased buffers keep the original pixels / labels there.
        input_output_aliases={1: 0, 2: 1},
        compiler_params=pltpu.CompilerParams(
            dimension_semantics=("parallel", "parallel")),
    )(offs, image, label, ood_win, msk_win)

    return out_img, out_lab, (x_index, y_index)


if __name__ == "__main__":
    def run_case(key, alpha, rng_seed, W, H, wo, ho, block_w, block_h):
        k_img, k_lab, k_ood, k_msk = jax.random.split(key, 4)
        C = 3
        horizon = 6.0

        image = jax.random.uniform(k_img, (C, W, H), jnp.float32)
        label = jax.random.randint(k_lab, (W, H), 0, 19, dtype=jnp.int32)
        outlier = jax.random.uniform(k_ood, (C, wo, ho), jnp.float32)
        mask = (jax.random.uniform(k_msk, (wo, ho)) > 0.5).astype(jnp.float32)

        # Pure-JAX reference with the module's exact expression order.  Computed BEFORE
        # the pallas_call because image/label may be donated through input_output_aliases.
        xi, yi = sample_paste_position(horizon, image.shape, outlier.shape, rng_seed)
        mask_full = lax.dynamic_update_slice(
            jnp.zeros((W, H), jnp.float32), mask, (xi, yi))
        ood_full = lax.dynamic_update_slice(
            jnp.zeros((C, W, H), jnp.float32), outlier, (0, xi, yi))
        ref_img = image - alpha * mask_full[None] * image + alpha * ood_full * mask_full[None]
        ref_lab = jnp.where(mask_full != 0, jnp.int32(IGNORE_LABEL), label)
        ref_img, ref_lab = jax.block_until_ready((ref_img, ref_lab))

        out_img, out_lab, (xo, yo) = outlier_injection(
            image, label, outlier, mask, horizon,
            alpha_blend=alpha, rng_seed=rng_seed, block_w=block_w, block_h=block_h)
        jax.block_until_ready(out_img)
        jax.block_until_ready(out_lab)

        assert (xo, yo) == (xi, yi)
        assert out_img.dtype == jnp.float32 and out_lab.dtype == jnp.int32
        assert jnp.allclose(out_img, ref_img, atol=1e-5, rtol=1e-5)
        assert jnp.array_equal(out_lab, ref_lab)

    base = jax.random.PRNGKey(0)
    # Small frame, single H block.
    run_case(jax.random.fold_in(base, 1), alpha=1.0, rng_seed=0,
             W=32, H=128, wo=12, ho=48, block_w=8, block_h=128)
    # Wider frame: H windowing kicks in (2 of 2 blocks here, more savings at real sizes).
    run_case(jax.random.fold_in(base, 2), alpha=0.6, rng_seed=7,
             W=64, H=256, wo=20, ho=40, block_w=8, block_h=128)
    print("KERNEL_OK")
</pallas_src>

<mosaic_0001>
module attributes {stable_mosaic.version = 11 : i64} {
  func.func @kernel(%arg0: i32, %arg1: i32, %arg2: memref<2xi32, #tpu.memory_space<smem>>, %arg3: memref<3x8x128xf32, #tpu.memory_space<vmem>>, %arg4: memref<8x128xi32, #tpu.memory_space<vmem>>, %arg5: memref<3x8x128xf32, #tpu.memory_space<vmem>>, %arg6: memref<8x128xf32, #tpu.memory_space<vmem>>, %arg7: memref<3x8x128xf32, #tpu.memory_space<vmem>>, %arg8: memref<8x128xi32, #tpu.memory_space<vmem>>) attributes {dimension_semantics = [#tpu.dimension_semantics<parallel>, #tpu.dimension_semantics<parallel>], iteration_bounds = array<i64: 3, 1>, scalar_prefetch = 1 : i64, scratch_operands = 0 : i64, tpu.core_type = #tpu.core_type<tc>, window_params = [{transform_indices = @transform_0, window_bounds = array<i64: 3, 8, 128>}, {transform_indices = @transform_1, window_bounds = array<i64: 8, 128>}, {transform_indices = @transform_2, window_bounds = array<i64: 3, 8, 128>}, {transform_indices = @transform_3, window_bounds = array<i64: 8, 128>}, {transform_indices = @transform_4, window_bounds = array<i64: 3, 8, 128>}, {transform_indices = @transform_5, window_bounds = array<i64: 8, 128>}]} {
    %c0 = arith.constant 0 : index
    %c0_0 = arith.constant 0 : index
    %0 = vector.load %arg6[%c0, %c0_0] : memref<8x128xf32, #tpu.memory_space<vmem>>, vector<8x128xf32>
    %c0_1 = arith.constant 0 : index
    %c0_2 = arith.constant 0 : index
    %c0_3 = arith.constant 0 : index
    %1 = vector.load %arg3[%c0_1, %c0_2, %c0_3] : memref<3x8x128xf32, #tpu.memory_space<vmem>>, vector<3x8x128xf32>
    %c0_4 = arith.constant 0 : index
    %c0_5 = arith.constant 0 : index
    %c0_6 = arith.constant 0 : index
    %2 = vector.load %arg5[%c0_4, %c0_5, %c0_6] : memref<3x8x128xf32, #tpu.memory_space<vmem>>, vector<3x8x128xf32>
    %3 = vector.shape_cast %0 : vector<8x128xf32> to vector<1x8x128xf32>
    %4 = arith.subf %2, %1 : vector<3x8x128xf32>
    %5 = vector.broadcast %3 : vector<1x8x128xf32> to vector<3x8x128xf32>
    %6 = arith.mulf %5, %4 : vector<3x8x128xf32>
    %cst = arith.constant 1.000000e+00 : f32
    %7 = vector.broadcast %cst : f32 to vector<3x8x128xf32>
    %8 = arith.mulf %7, %6 : vector<3x8x128xf32>
    %9 = arith.addf %1, %8 : vector<3x8x128xf32>
    %c0_7 = arith.constant 0 : index
    %c0_8 = arith.constant 0 : index
    %c0_9 = arith.constant 0 : index
    %10 = vector.load %arg7[%c0_7, %c0_8, %c0_9] : memref<3x8x128xf32, #tpu.memory_space<vmem>>, vector<3x8x128xf32>
    tpu.vector_store %arg7[%c0_7, %c0_8, %c0_9], %9 {strides = array<i32>} : memref<3x8x128xf32, #tpu.memory_space<vmem>>, vector<3x8x128xf32>,
    %cst_10 = arith.constant 0.000000e+00 : f32
    %11 = vector.broadcast %cst_10 : f32 to vector<8x128xf32>
    %12 = arith.cmpf one, %0, %11 : vector<8x128xf32>
    %c0_11 = arith.constant 0 : index
    %c0_12 = arith.constant 0 : index
    %13 = vector.load %arg4[%c0_11, %c0_12] : memref<8x128xi32, #tpu.memory_space<vmem>>, vector<8x128xi32>
    %c101_i32 = arith.constant 101 : i32
    %14 = vector.broadcast %c101_i32 : i32 to vector<8x128xi32>
    %15 = arith.select %12, %14, %13 : vector<8x128xi1>, vector<8x128xi32>
    %c0_13 = arith.constant 0 : index
    %c0_14 = arith.constant 0 : index
    %16 = vector.load %arg8[%c0_13, %c0_14] : memref<8x128xi32, #tpu.memory_space<vmem>>, vector<8x128xi32>
    tpu.vector_store %arg8[%c0_13, %c0_14], %15 {strides = array<i32>} : memref<8x128xi32, #tpu.memory_space<vmem>>, vector<8x128xi32>,
    return
  }
  func.func @transform_0(%arg0: i32, %arg1: i32, %arg2: memref<2xi32, #tpu.memory_space<smem>>) -> (i32, i32, i32) {
    %c0 = arith.constant 0 : index
    %0 = memref.load %arg2[%c0] : memref<2xi32, #tpu.memory_space<smem>>
    %1 = arith.addi %0, %arg0 : i32
    %c1 = arith.constant 1 : index
    %2 = memref.load %arg2[%c1] : memref<2xi32, #tpu.memory_space<smem>>
    %3 = arith.addi %2, %arg1 : i32
    %c0_i32 = arith.constant 0 : i32
    %c0_i32_0 = arith.constant 0 : i32
    return %c0_i32, %1, %3 : i32, i32, i32
  }
  func.func @transform_1(%arg0: i32, %arg1: i32, %arg2: memref<2xi32, #tpu.memory_space<smem>>) -> (i32, i32) {
    %c0 = arith.constant 0 : index
    %0 = memref.load %arg2[%c0] : memref<2xi32, #tpu.memory_space<smem>>
    %1 = arith.addi %0, %arg0 : i32
    %c1 = arith.constant 1 : index
    %2 = memref.load %arg2[%c1] : memref<2xi32, #tpu.memory_space<smem>>
    %3 = arith.addi %2, %arg1 : i32
    %c0_i32 = arith.constant 0 : i32
    return %1, %3 : i32, i32
  }
  func.func @transform_2(%arg0: i32, %arg1: i32, %arg2: memref<2xi32, #tpu.memory_space<smem>>) -> (i32, i32, i32) {
    %c0_i32 = arith.constant 0 : i32
    %c0_i32_0 = arith.constant 0 : i32
    return %c0_i32, %arg0, %arg1 : i32, i32, i32
  }
  func.func @transform_3(%arg0: i32, %arg1: i32, %arg2: memref<2xi32, #tpu.memory_space<smem>>) -> (i32, i32) {
    %c0_i32 = arith.constant 0 : i32
    return %arg0, %arg1 : i32, i32
  }
  func.func @transform_4(%arg0: i32, %arg1: i32, %arg2: memref<2xi32, #tpu.memory_space<smem>>) -> (i32, i32, i32) {
    %c0 = arith.constant 0 : index
    %0 = memref.load %arg2[%c0] : memref<2xi32, #tpu.memory_space<smem>>
    %1 = arith.addi %0, %arg0 : i32
    %c1 = arith.constant 1 : index
    %2 = memref.load %arg2[%c1] : memref<2xi32, #tpu.memory_space<smem>>
    %3 = arith.addi %2, %arg1 : i32
    %c0_i32 = arith.constant 0 : i32
    %c0_i32_0 = arith.constant 0 : i32
    return %c0_i32, %1, %3 : i32, i32, i32
  }
  func.func @transform_5(%arg0: i32, %arg1: i32, %arg2: memref<2xi32, #tpu.memory_space<smem>>) -> (i32, i32) {
    %c0 = arith.constant 0 : index
    %0 = memref.load %arg2[%c0] : memref<2xi32, #tpu.memory_space<smem>>
    %1 = arith.addi %0, %arg0 : i32
    %c1 = arith.constant 1 : index
    %2 = memref.load %arg2[%c1] : memref<2xi32, #tpu.memory_space<smem>>
    %3 = arith.addi %2, %arg1 : i32
    %c0_i32 = arith.constant 0 : i32
    return %1, %3 : i32, i32
  }
}

</mosaic_0001>

<llo_original>
// kernel: tpu_custom_call.1
$region0: #{tpu_custom_call.1}
  #allocation0 [shape = 'u32[]', space=smem, size = 0x4, offset = 0x4, fixed_abs, tag = 'smem constant byte address 0x4 - core index']
  #allocation1 [shape = 'u32[144,128]{1,0:T(1,128)}', space=vmem, size = 0x12000, scoped, tag = 'internal scratch']
  #allocation2 [shape = 's32[1]{0}', space=sflag, size = 0x4, scoped, tag = 'scoped memory for tpu_custom_call.1']
  #allocation3 [shape = 'u8[512]{0}', space=smem, size = 0x200, scoped, tag = 'prefetched SMEM operand 0']
  %s0 = inlined_call_operand.vmem [shape: s32[2], index: 0, kind: input, shape index: {}]
  %s1 = inlined_call_operand.hbm [shape: f32[3,32,128], index: 1, kind: input, shape index: {}, may-alias: {1,5}]
  %s2 = inlined_call_operand.hbm [shape: s32[32,128], index: 2, kind: input, shape index: {}, may-alias: {2,6}]
  %s3 = inlined_call_operand.vmem [shape: f32[3,24,128], index: 3, kind: input, shape index: {}]
  %s4 = inlined_call_operand.vmem [shape: f32[24,128], index: 4, kind: input, shape index: {}]
  %s5 = inlined_call_operand.hbm [shape: f32[3,32,128], index: 5, kind: output, shape index: {0}, may-alias: {1,5}]
  %s6 = inlined_call_operand.hbm [shape: s32[32,128], index: 6, kind: output, shape index: {1}, may-alias: {2,6}]
  %7 = xla_tuple %s5, %s6
  %s8 = sld [smem:[#allocation0]]
  $region103: #{tpu_custom_call.1} parent=0
    _
  %s10 = ssub.s32 1, %s8
  %s11 = scalar_select 0, %s10, %s8
  %s12 = sshll.u32 %s0, 4
  %s13 = int_to_ptr.vmem [resolvable:$true] %s12
  %15 = dma.vmem_to_smem %s13, 16, [#allocation3], [#allocation2]
  %16 = dma.done [#allocation2], 16
  %17 = sfence
  $region1: #{tpu_custom_call.1} parent=0
    #allocation4 [shape = 'u8[24576]{0}', space=vmem, size = 0x6000, scoped, tag = 'input window, operand 1']
    #allocation5 [shape = 's32[2]{0}', space=sflag, size = 0x8, scoped, tag = 'scoped memory for tpu_custom_call.1']
    #allocation6 [shape = 's32[2]{0}', space=sflag, size = 0x8, scoped, tag = 'scoped memory for tpu_custom_call.1']
    #allocation7 [shape = 'u8[8192]{0}', space=vmem, size = 0x2000, scoped, tag = 'input window, operand 2']
    #allocation8 [shape = 's32[2]{0}', space=sflag, size = 0x8, scoped, tag = 'scoped memory for tpu_custom_call.1']
    #allocation9 [shape = 'u8[24576]{0}', space=vmem, size = 0x6000, scoped, tag = 'input window, operand 3']
    #allocation10 [shape = 'u8[24576]{0}', space=vmem, size = 0x6000, scoped, tag = 'output window, operand 0']
    #allocation11 [shape = 'u8[8192]{0}', space=vmem, size = 0x2000, scoped, tag = 'output window, operand 1']
    #allocation12 [shape = 's32[2]{0}', space=sflag, size = 0x8, scoped, tag = 'scoped memory for tpu_custom_call.1']
    %18 = vsyncpa [#allocation5], 0
    %s19 = scalar_lea.sflag [#allocation5], 1
    %20 = vsyncpa %s19, 0
    %21 = vsyncpa [#allocation8], 0
    %s22 = scalar_lea.sflag [#allocation8], 1
    %23 = vsyncpa %s22, 0
    %24 = vsyncpa [#allocation6], 0
    %s25 = scalar_lea.sflag [#allocation6], 1
    %26 = vsyncpa %s25, 0
    %27 = vsyncpa [#allocation12], 0
    %s28 = scalar_lea.sflag [#allocation12], 1
    %29 = vsyncpa %s28, 0
    loop: start=0, step=1, limit=5
    $region2: #{tpu_custom_call.1} parent=1 // loop_pre_header
      _
    $region3: #{tpu_custom_call.1} parent=1 // loop_header
      %s31 = sphi 0, %s35
      %p32 = scmp.ge.s32.totalorder %s31, 5
      %s38 = sphi 0, %s50
      %s39 = sphi 0, %s46
      %s40 = sphi 0, %s38
      %s41 = sphi 0, %s39
      %s42 = sphi 0, %s40
      %s43 = sphi 0, %s41
      %s63 = sphi 0, %s65
      %s66 = sphi 0, %s63
      %s67 = sphi 0, %s66
      %s83 = sphi 0, %s67
      %s99 = sphi 0, %s101
      %s102 = sphi 0, %s99
      %s103 = sphi 0, %s102
      %s119 = sphi 0, %s103
      %s127 = sphi 0, %s129
      %s130 = sphi 0, %s127
      %s131 = sphi 0, %s130
      %s147 = sphi 0, %s131
      %s155 = sphi 0, %s157
      %s158 = sphi 0, %s155
      %s159 = sphi 0, %s158
      %s175 = sphi 0, %s159
      %s191 = sphi 0, %s193
      %s194 = sphi 0, %s191
      %s195 = sphi 0, %s194
      %s211 = sphi 0, %s195
      %s227 = sphi 0, %s229
      %s230 = sphi 0, %s227
      %s231 = sphi 0, %s230
      %s247 = sphi 0, %s231
    $region4: #{tpu_custom_call.1} parent=1 // loop_header_branch
      %34 = sbr.rel (%p32) target = $region8
    $region5: #{tpu_custom_call.1} parent=1 // loop_body
      %s36 = ssub.s32 %s31, 1
      %s37 = ssub.s32 %s31, 2
      %s44 = sadd.s32 1, %s39
      %p45 = scmp.ge.s32.totalorder %s44, 1
      %s46 = scalar_select %p45, 0, %s44
      %s47 = sadd.s32 1, %s38
      %s48 = scalar_select %p45, %s47, %s38
      %p49 = scmp.ge.s32.totalorder %s48, 3
      %s50 = scalar_select %p49, 0, %s48
      %s51 = sld [smem:[#allocation3]]
      %s52 = sadd.s32 %s51, %s38
      %s53 = sld [smem:[#allocation3 + $0x1]]
      %s54 = sadd.s32 %s53, %s39
      %s55 = sld [smem:[#allocation3]]
      %s56 = sadd.s32 %s55, %s50
      %s57 = sld [smem:[#allocation3 + $0x1]]
      %s58 = sadd.s32 %s57, %s46
      %s59 = ssub.s32 %s52, %s56
      %s60 = ssub.s32 %s54, %s58
      %s61 = sor.u32 %s59, %s60
      %p62 = scmp.eq.s32.totalorder %s61, 0
      %s64 = sadd.s32 %s63, 1
      %s65 = scalar_select %p62, %s63, %s64
      %p68 = pneg %p62
      %p69 = scmp.eq.s32.totalorder %s31, 2
      %p70 = por %p68, %p69
      %p71 = scmp.ne.s32.totalorder %s63, %s66
      %p72 = scmp.eq.s32.totalorder %s31, 0
      %p73 = por %p71, %p72
      %p74 = scmp.ne.s32.totalorder %s63, %s66
      %p75 = scmp.eq.s32.totalorder %s36, 2
      %p76 = por %p74, %p75
      %p77 = scmp.ne.s32.totalorder %s66, %s67
      %p78 = scmp.eq.s32.totalorder %s36, 0
      %p79 = por %p77, %p78
      %p80 = scmp.ne.s32.totalorder %s66, %s67
      %p81 = scmp.eq.s32.totalorder %s37, 2
      %p82 = por %p80, %p81
      %p84 = scmp.ne.s32.totalorder %s67, %s83
      %p85 = scmp.eq.s32.totalorder %s37, 0
      %p86 = por %p84, %p85
      %s87 = sld [smem:[#allocation3]]
      %s88 = sadd.s32 %s87, %s38
      %s89 = sld [smem:[#allocation3 + $0x1]]
      %s90 = sadd.s32 %s89, %s39
      %s91 = sld [smem:[#allocation3]]
      %s92 = sadd.s32 %s91, %s50
      %s93 = sld [smem:[#allocation3 + $0x1]]
      %s94 = sadd.s32 %s93, %s46
      %s95 = ssub.s32 %s88, %s92
      %s96 = ssub.s32 %s90, %s94
      %s97 = sor.u32 %s95, %s96
      %p98 = scmp.eq.s32.totalorder %s97, 0
      %s100 = sadd.s32 %s99, 1
      %s101 = scalar_select %p98, %s99, %s100
      %p104 = pneg %p98
      %p105 = scmp.eq.s32.totalorder %s31, 2
      %p106 = por %p104, %p105
      %p107 = scmp.ne.s32.totalorder %s99, %s102
      %p108 = scmp.eq.s32.totalorder %s31, 0
      %p109 = por %p107, %p108
      %p110 = scmp.ne.s32.totalorder %s99, %s102
      %p111 = scmp.eq.s32.totalorder %s36, 2
      %p112 = por %p110, %p111
      %p113 = scmp.ne.s32.totalorder %s102, %s103
      %p114 = scmp.eq.s32.totalorder %s36, 0
      %p115 = por %p113, %p114
      %p116 = scmp.ne.s32.totalorder %s102, %s103
      %p117 = scmp.eq.s32.totalorder %s37, 2
      %p118 = por %p116, %p117
      %p120 = scmp.ne.s32.totalorder %s103, %s119
      %p121 = scmp.eq.s32.totalorder %s37, 0
      %p122 = por %p120, %p121
      %s123 = ssub.s32 %s38, %s50
      %s124 = ssub.s32 %s39, %s46
      %s125 = sor.u32 %s123, %s124
      %p126 = scmp.eq.s32.totalorder %s125, 0
      %s128 = sadd.s32 %s127, 1
      %s129 = scalar_select %p126, %s127, %s128
      %p132 = pneg %p126
      %p133 = scmp.eq.s32.totalorder %s31, 2
      %p134 = por %p132, %p133
      %p135 = scmp.ne.s32.totalorder %s127, %s130
      %p136 = scmp.eq.s32.totalorder %s31, 0
      %p137 = por %p135, %p136
      %p138 = scmp.ne.s32.totalorder %s127, %s130
      %p139 = scmp.eq.s32.totalorder %s36, 2
      %p140 = por %p138, %p139
      %p141 = scmp.ne.s32.totalorder %s130, %s131
      %p142 = scmp.eq.s32.totalorder %s36, 0
      %p143 = por %p141, %p142
      %p144 = scmp.ne.s32.totalorder %s130, %s131
      %p145 = scmp.eq.s32.totalorder %s37, 2
      %p146 = por %p144, %p145
      %p148 = scmp.ne.s32.totalorder %s131, %s147
      %p149 = scmp.eq.s32.totalorder %s37, 0
      %p150 = por %p148, %p149
      %s151 = ssub.s32 %s38, %s50
      %s152 = ssub.s32 %s39, %s46
      %s153 = sor.u32 %s151, %s152
      %p154 = scmp.eq.s32.totalorder %s153, 0
      %s156 = sadd.s32 %s155, 1
      %s157 = scalar_select %p154, %s155, %s156
      %p160 = pneg %p154
      %p161 = scmp.eq.s32.totalorder %s31, 2
      %p162 = por %p160, %p161
      %p163 = scmp.ne.s32.totalorder %s155, %s158
      %p164 = scmp.eq.s32.totalorder %s31, 0
      %p165 = por %p163, %p164
      %p166 = scmp.ne.s32.totalorder %s155, %s158
      %p167 = scmp.eq.s32.totalorder %s36, 2
      %p168 = por %p166, %p167
      %p169 = scmp.ne.s32.totalorder %s158, %s159
      %p170 = scmp.eq.s32.totalorder %s36, 0
      %p171 = por %p169, %p170
      %p172 = scmp.ne.s32.totalorder %s158, %s159
      %p173 = scmp.eq.s32.totalorder %s37, 2
      %p174 = por %p172, %p173
      %p176 = scmp.ne.s32.totalorder %s159, %s175
      %p177 = scmp.eq.s32.totalorder %s37, 0
      %p178 = por %p176, %p177
      %s179 = sld [smem:[#allocation3]]
      %s180 = sadd.s32 %s179, %s38
      %s181 = sld [smem:[#allocation3 + $0x1]]
      %s182 = sadd.s32 %s181, %s39
      %s183 = sld [smem:[#allocation3]]
      %s184 = sadd.s32 %s183, %s50
      %s185 = sld [smem:[#allocation3 + $0x1]]
      %s186 = sadd.s32 %s185, %s46
      %s187 = ssub.s32 %s180, %s184
      %s188 = ssub.s32 %s182, %s186
      %s189 = sor.u32 %s187, %s188
      %p190 = scmp.eq.s32.totalorder %s189, 0
      %s192 = sadd.s32 %s191, 1
      %s193 = scalar_select %p190, %s191, %s192
      %p196 = pneg %p190
      %p197 = scmp.eq.s32.totalorder %s31, 2
      %p198 = por %p196, %p197
      %p199 = scmp.ne.s32.totalorder %s191, %s194
      %p200 = scmp.eq.s32.totalorder %s31, 0
      %p201 = por %p199, %p200
      %p202 = scmp.ne.s32.totalorder %s191, %s194
      %p203 = scmp.eq.s32.totalorder %s36, 2
      %p204 = por %p202, %p203
      %p205 = scmp.ne.s32.totalorder %s194, %s195
      %p206 = scmp.eq.s32.totalorder %s36, 0
      %p207 = por %p205, %p206
      %p208 = scmp.ne.s32.totalorder %s194, %s195
      %p209 = scmp.eq.s32.totalorder %s37, 2
      %p210 = por %p208, %p209
      %p212 = scmp.ne.s32.totalorder %s195, %s211
      %p213 = scmp.eq.s32.totalorder %s37, 0
      %p214 = por %p212, %p213
      %s215 = sld [smem:[#allocation3]]
      %s216 = sadd.s32 %s215, %s38
      %s217 = sld [smem:[#allocation3 + $0x1]]
      %s218 = sadd.s32 %s217, %s39
      %s219 = sld [smem:[#allocation3]]
      %s220 = sadd.s32 %s219, %s50
      %s221 = sld [smem:[#allocation3 + $0x1]]
      %s222 = sadd.s32 %s221, %s46
      %s223 = ssub.s32 %s216, %s220
      %s224 = ssub.s32 %s218, %s222
      %s225 = sor.u32 %s223, %s224
      %p226 = scmp.eq.s32.totalorder %s225, 0
      %s228 = sadd.s32 %s227, 1
      %s229 = scalar_select %p226, %s227, %s228
      %p232 = pneg %p226
      %p233 = scmp.eq.s32.totalorder %s31, 2
      %p234 = por %p232, %p233
      %p235 = scmp.ne.s32.totalorder %s227, %s230
      %p236 = scmp.eq.s32.totalorder %s31, 0
      %p237 = por %p235, %p236
      %p238 = scmp.ne.s32.totalorder %s227, %s230
      %p239 = scmp.eq.s32.totalorder %s36, 2
      %p240 = por %p238, %p239
      %p241 = scmp.ne.s32.totalorder %s230, %s231
      %p242 = scmp.eq.s32.totalorder %s36, 0
      %p243 = por %p241, %p242
      %p244 = scmp.ne.s32.totalorder %s230, %s231
      %p245 = scmp.eq.s32.totalorder %s37, 2
      %p246 = por %p244, %p245
      %p248 = scmp.ne.s32.totalorder %s231, %s247
      %p249 = scmp.eq.s32.totalorder %s37, 0
      %p250 = por %p248, %p249
      %p251 = scmp.le.s32.totalorder 1, %s31
      %p252 = scmp.lt.s32.totalorder %s31, 4
      %p253 = pnand %p251, %p252
      %p254 = pneg %p253
      // Predicated region
      $region9: #{tpu_custom_call.1} parent=5 // pred_check
        _
      $region10: #{tpu_custom_call.1} parent=5 // pred_check_branch
        %256 = sbr.rel (%p253) target = $region12
      $region11: #{tpu_custom_call.1} parent=5 // pred_region
        %s257 = ssub.s32 %s31, 1
      $region12: #{tpu_custom_call.1} parent=5 // pred_fallthru
        _
      %p258 = scmp.lt.s32.totalorder %s31, 3
      // Predicated region
      $region13: #{tpu_custom_call.1} parent=5 // pred_check
        %p259 = pneg %p258
      $region14: #{tpu_custom_call.1} parent=5 // pred_check_branch
        %261 = sbr.rel (%p259) target = $region16
      $region15: #{tpu_custom_call.1} parent=5 // pred_region
        // Predicated region
        $region17: #{tpu_custom_call.1} parent=15 // pred_check
          %p262 = pneg %p73
        $region18: #{tpu_custom_call.1} parent=15 // pred_check_branch
          %264 = sbr.rel (%p262) target = $region20
        $region19: #{tpu_custom_call.1} parent=15 // pred_region
          %s265 = sand.u32 %s63, 1
          %s266 = scalar_lea.sflag [#allocation5], %s265
          %s267 = sand.u32 %s63, 1
          %s268 = smul.addr %s267, 24
          %s269 = scalar_lea.vmem [#allocation4], %s268
          %s270 = sld [smem:[#allocation3]]
          %s271 = sadd.s32 %s270, %s38
          %s272 = sld [smem:[#allocation3 + $0x1]]
          %s273 = sadd.s32 %s272, %s39
          %s275 = ssub.s32 384, 384
          %276 = vsyncadd %s266, %s275
          %s277 = sadd.s32 %s273, %s271
          %s278 = smul.addr %s277, 128
          %s279 = scalar_lea.hbm %s1, %s278
          %s280 = sshll.u32 %s269, 4
          %s281 = int_to_ptr.vmem [resolvable:$true] %s280
          %286 = dma.hbm_to_vmem [thread:$0]  %s279, 384, %s281, %s266, 512, 128, 8
        $region20: #{tpu_custom_call.1} parent=15 // pred_fallthru
          _
        // Predicated region
        $region21: #{tpu_custom_call.1} parent=15 // pred_check
          %p287 = pneg %p109
        $region22: #{tpu_custom_call.1} parent=15 // pred_check_branch
          %289 = sbr.rel (%p287) target = $region24
        $region23: #{tpu_custom_call.1} parent=15 // pred_region
          %s290 = sand.u32 %s99, 1
          %s291 = scalar_lea.sflag [#allocation8], %s290
          %s292 = sand.u32 %s99, 1
          %s293 = smul.addr %s292, 8
          %s294 = scalar_lea.vmem [#allocation7], %s293
          %s295 = sld [smem:[#allocation3]]
          %s296 = sadd.s32 %s295, %s38
          %s297 = sld [smem:[#allocation3 + $0x1]]
          %s298 = sadd.s32 %s297, %s39
          %s300 = ssub.s32 128, 128
          %301 = vsyncadd %s291, %s300
          %s302 = sadd.s32 %s298, %s296
          %s303 = smul.addr %s302, 128
          %s304 = scalar_lea.hbm %s2, %s303
          %s306 = sshll.u32 %s294, 4
          %s307 = int_to_ptr.vmem [resolvable:$true] %s306
          %309 = dma.hbm_to_vmem [thread:$0]  %s304, 128, %s307, %s291
        $region24: #{tpu_custom_call.1} parent=15 // pred_fallthru
          _
        // Predicated region
        $region25: #{tpu_custom_call.1} parent=15 // pred_check
          %p310 = pneg %p137
        $region26: #{tpu_custom_call.1} parent=15 // pred_check_branch
          %312 = sbr.rel (%p310) target = $region28
        $region27: #{tpu_custom_call.1} parent=15 // pred_region
          %s313 = sand.u32 %s127, 1
          %s314 = sand.u32 %s127, 1
          %s315 = smul.addr %s314, 24
          %s316 = scalar_lea.vmem [#allocation9], %s315
          %s317 = sadd.s32 %s39, %s38
          %s318 = smul.addr %s317, 8
          %s319 = scalar_lea.vmem %s3, %s318
          // Predicated region
          $region29: #{tpu_custom_call.1} parent=27 // pred_check
            _
          $region30: #{tpu_custom_call.1} parent=27 // pred_check_branch
            %321 = sbr.rel (0) target = $region32
          $region31: #{tpu_custom_call.1} parent=27 // pred_region
            // Predicated region
            $region33: #{tpu_custom_call.1} parent=31 // pred_check
              _
            $region34: #{tpu_custom_call.1} parent=31 // pred_check_branch
              %323 = sbr.rel (0) target = $region36
            $region35: #{tpu_custom_call.1} parent=31 // pred_region
              // Predicated region
              $region48: #{tpu_custom_call.1} parent=35 // pred_check
                _
              $region49: #{tpu_custom_call.1} parent=35 // pred_check_branch
                %343 = sbr.rel (0) target = $region51
              $region50: #{tpu_custom_call.1} parent=35 // pred_region
                loop: start=0, step=1, limit=1
                $region52: #{tpu_custom_call.1} parent=50 // loop_pre_header
                  _
                $region53: #{tpu_custom_call.1} parent=50 // loop_header
                  %s345 = sphi 0, %s349
                  %p346 = scmp.ge.s32.totalorder %s345, 1
                  %s350 = sphi %s319, %s319
                  %s351 = sphi %s316, %s316
                $region54: #{tpu_custom_call.1} parent=50 // loop_header_branch
                  %348 = sbr.rel (%p346) target = $region58
                $region55: #{tpu_custom_call.1} parent=50 // loop_body
                  %v352 = vld [vmem:[%s350] sm:$0xff]
                  %353 = vst [vmem:[%s351] sm:$0xff] %v352
                  %v354 = vld [vmem:[%s350 + $0x18] sm:$0xff]
                  %355 = vst [vmem:[%s351 + $0x8] sm:$0xff] %v354
                  %v356 = vld [vmem:[%s350 + $0x30] sm:$0xff]
                  %357 = vst [vmem:[%s351 + $0x10] sm:$0xff] %v356
                $region56: #{tpu_custom_call.1} parent=50 // loop_footer
                  %s349 = sadd.s32 1, %s345
                $region57: #{tpu_custom_call.1} parent=50 // loop_footer_branch
                  %344 = sbr.rel target = $region53
                $region58: #{tpu_custom_call.1} parent=50 // loop_exit
                  _
              $region51: #{tpu_custom_call.1} parent=35 // pred_fallthru
                _
              // Predicated region
              $region59: #{tpu_custom_call.1} parent=35 // pred_check
                _
              $region60: #{tpu_custom_call.1} parent=35 // pred_check_branch
                %359 = sbr.rel target = $region62
              $region61: #{tpu_custom_call.1} parent=35 // pred_region
                _
              $region62: #{tpu_custom_call.1} parent=35 // pred_fallthru
                _
            $region36: #{tpu_custom_call.1} parent=31 // pred_fallthru
              _
            // Predicated region
            $region37: #{tpu_custom_call.1} parent=31 // pred_check
              _
            $region38: #{tpu_custom_call.1} parent=31 // pred_check_branch
              %325 = sbr.rel target = $region40
            $region39: #{tpu_custom_call.1} parent=31 // pred_region
              %s327 = ssub.s32 256, 1
              loop: start=0, step=1, limit=1
              $region41: #{tpu_custom_call.1} parent=39 // loop_pre_header
                _
              $region42: #{tpu_custom_call.1} parent=39 // loop_header
                %s329 = sphi 0, %s333
                %p330 = scmp.ge.s32.totalorder %s329, 1
                %s334 = sphi %s319, %s319
                %s335 = sphi %s316, %s316
              $region43: #{tpu_custom_call.1} parent=39 // loop_header_branch
                %332 = sbr.rel (%p330) target = $region47
              $region44: #{tpu_custom_call.1} parent=39 // loop_body
                %v336 = vld [vmem:[%s334] sm:%s327]
                %337 = vst [vmem:[%s335] sm:%s327] %v336
                %v338 = vld [vmem:[%s334 + $0x18] sm:%s327]
                %339 = vst [vmem:[%s335 + $0x8] sm:%s327] %v338
                %v340 = vld [vmem:[%s334 + $0x30] sm:%s327]
                %341 = vst [vmem:[%s335 + $0x10] sm:%s327] %v340
              $region45: #{tpu_custom_call.1} parent=39 // loop_footer
                %s333 = sadd.s32 1, %s329
              $region46: #{tpu_custom_call.1} parent=39 // loop_footer_branch
                %328 = sbr.rel target = $region42
              $region47: #{tpu_custom_call.1} parent=39 // loop_exit
                _
            $region40: #{tpu_custom_call.1} parent=31 // pred_fallthru
              _
          $region32: #{tpu_custom_call.1} parent=27 // pred_fallthru
            _
          %360 = vnop
        $region28: #{tpu_custom_call.1} parent=15 // pred_fallthru
          _
        // Predicated region
        $region63: #{tpu_custom_call.1} parent=15 // pred_check
          %p361 = pneg %p165
        $region64: #{tpu_custom_call.1} parent=15 // pred_check_branch
          %363 = sbr.rel (%p361) target = $region66
        $region65: #{tpu_custom_call.1} parent=15 // pred_region
          %p364 = scmp.lt.s32.totalorder %s38, 2
          %s365 = scalar_select %p364, %s38, 2
          %p366 = scmp.lt.s32.totalorder %s39, 0
          %s367 = scalar_select %p366, %s39, 0
          %s368 = sadd.s32 %s367, %s365
          %s369 = smul.addr %s368, 8
          %s370 = scalar_lea.vmem %s4, %s369
        $region66: #{tpu_custom_call.1} parent=15 // pred_fallthru
          _
      $region16: #{tpu_custom_call.1} parent=5 // pred_fallthru
        _
      %p371 = scmp.le.s32.totalorder 1, %s31
      %p372 = scmp.lt.s32.totalorder %s31, 4
      %p373 = pnand %p371, %p372
      %p374 = pneg %p373
      // Predicated region
      $region67: #{tpu_custom_call.1} parent=5 // pred_check
        _
      $region68: #{tpu_custom_call.1} parent=5 // pred_check_branch
        %376 = sbr.rel (%p373) target = $region70
      $region69: #{tpu_custom_call.1} parent=5 // pred_region
        %s377 = ssub.s32 %s31, 1
        %s378 = sand.u32 %s66, 1
        %s379 = scalar_lea.sflag [#allocation5], %s378
        %s380 = sand.u32 %s66, 1
        %s381 = smul.addr %s380, 24
        %s382 = scalar_lea.vmem [#allocation4], %s381
        // Predicated region
        $region71: #{tpu_custom_call.1} parent=69 // pred_check
          %p383 = pneg %p79
        $region72: #{tpu_custom_call.1} parent=69 // pred_check_branch
          %385 = sbr.rel (%p383) target = $region74
        $region73: #{tpu_custom_call.1} parent=69 // pred_region
          %386 = dma.done %s379, 384
        $region74: #{tpu_custom_call.1} parent=69 // pred_fallthru
          _
        %s387 = sand.u32 %s102, 1
        %s388 = scalar_lea.sflag [#allocation8], %s387
        %s389 = sand.u32 %s102, 1
        %s390 = smul.addr %s389, 8
        %s391 = scalar_lea.vmem [#allocation7], %s390
        // Predicated region
        $region75: #{tpu_custom_call.1} parent=69 // pred_check
          %p392 = pneg %p115
        $region76: #{tpu_custom_call.1} parent=69 // pred_check_branch
          %394 = sbr.rel (%p392) target = $region78
        $region77: #{tpu_custom_call.1} parent=69 // pred_region
          %395 = dma.done %s388, 128
        $region78: #{tpu_custom_call.1} parent=69 // pred_fallthru
          _
        %s396 = sand.u32 %s130, 1
        %s397 = sand.u32 %s130, 1
        %s398 = smul.addr %s397, 24
        %s399 = scalar_lea.vmem [#allocation9], %s398
        // Predicated region
        $region79: #{tpu_custom_call.1} parent=69 // pred_check
          %p400 = pneg %p143
        $region80: #{tpu_custom_call.1} parent=69 // pred_check_branch
          %402 = sbr.rel (%p400) target = $region82
        $region81: #{tpu_custom_call.1} parent=69 // pred_region
          _
        $region82: #{tpu_custom_call.1} parent=69 // pred_fallthru
          _
        %s403 = sand.u32 %s66, 1
        %s404 = scalar_lea.sflag [#allocation5], %s403
        %s405 = sand.u32 %s66, 1
        %s406 = smul.addr %s405, 24
        %s407 = scalar_lea.vmem [#allocation4], %s406
        %p408 = pneg %p79
        %p409 = pneg %p76
        %s410 = sand.u32 %s102, 1
        %s411 = scalar_lea.sflag [#allocation8], %s410
        %s412 = sand.u32 %s102, 1
        %s413 = smul.addr %s412, 8
        %s414 = scalar_lea.vmem [#allocation7], %s413
        %p415 = pneg %p115
        %p416 = pneg %p112
        %s417 = sand.u32 %s130, 1
        %s418 = sand.u32 %s130, 1
        %s419 = smul.addr %s418, 24
        %s420 = scalar_lea.vmem [#allocation9], %s419
        %p421 = pneg %p143
        %p422 = pneg %p140
        %p423 = scmp.lt.s32.totalorder %s40, 2
        %s424 = scalar_select %p423, %s40, 2
        %p425 = scmp.lt.s32.totalorder %s41, 0
        %s426 = scalar_select %p425, %s41, 0
        %s427 = sadd.s32 %s426, %s424
        %s428 = smul.addr %s427, 8
        %s429 = scalar_lea.vmem %s4, %s428
        %p430 = pneg %p171
        %p431 = pneg %p168
        %p432 = pneg %p207
        %p433 = pneg %p204
        %s434 = sand.u32 %s194, 1
        %s435 = scalar_lea.sflag [#allocation6], %s434
        %s436 = sand.u32 %s194, 1
        %s437 = smul.addr %s436, 24
        %s438 = scalar_lea.vmem [#allocation10], %s437
        %p439 = pneg %p243
        %p440 = pneg %p240
        %s441 = sand.u32 %s230, 1
        %s442 = scalar_lea.sflag [#allocation12], %s441
        %s443 = sand.u32 %s230, 1
        %s444 = smul.addr %s443, 8
        %s445 = scalar_lea.vmem [#allocation11], %s444
        %s446 = sld [smem:[#allocation3]]
        %s447 = sadd.s32 %s446, %s40
        %s448 = sld [smem:[#allocation3 + $0x1]]
        %s449 = sadd.s32 %s448, %s41
        %s450 = sld [smem:[#allocation3]]
        %s451 = sadd.s32 %s450, %s40
        %s452 = sld [smem:[#allocation3 + $0x1]]
        %s453 = sadd.s32 %s452, %s41
        %p454 = scmp.lt.s32.totalorder %s40, 2
        %s455 = scalar_select %p454, %s40, 2
        %p456 = scmp.lt.s32.totalorder %s41, 0
        %s457 = scalar_select %p456, %s41, 0
        %s458 = sadd.s32 %s457, %s455
        %s459 = smul.addr %s458, 8
        %s460 = scalar_lea.vmem %s4, %s459
        %s461 = sld [smem:[#allocation3]]
        %s462 = sadd.s32 %s461, %s40
        %s463 = sld [smem:[#allocation3 + $0x1]]
        %s464 = sadd.s32 %s463, %s41
        %s465 = sld [smem:[#allocation3]]
        %s466 = sadd.s32 %s465, %s40
        %s467 = sld [smem:[#allocation3 + $0x1]]
        %s468 = sadd.s32 %s467, %s41
        %v469 = vld [vmem:[%s460] sm:$0xff]
        %v470 = vld [vmem:[%s382] sm:$0xff]
        %v471 = vld [vmem:[%s382 + $0x8] sm:$0xff]
        %v472 = vld [vmem:[%s382 + $0x10] sm:$0xff]
        %v473 = vld [vmem:[%s399] sm:$0xff]
        %v474 = vld [vmem:[%s399 + $0x8] sm:$0xff]
        %v475 = vld [vmem:[%s399 + $0x10] sm:$0xff]
        %v476 = vsub.f32 %v473, %v470
        %v477 = vsub.f32 %v474, %v471
        %v478 = vsub.f32 %v475, %v472
        %v479 = vmul.f32 %v469, %v476
        %v480 = vmul.f32 %v469, %v477
        %v481 = vmul.f32 %v469, %v478
        %v482 = vadd.f32 %v470, %v479
        %v483 = vadd.f32 %v471, %v480
        %v484 = vadd.f32 %v472, %v481
        %485 = vst [vmem:[%s438] sm:$0xff] %v482
        %486 = vst [vmem:[%s438 + $0x8] sm:$0xff] %v483
        %487 = vst [vmem:[%s438 + $0x10] sm:$0xff] %v484
        %vm488 = vcmp.ne.f32.partialorder %v469, 0.0
        %v489 = vld [vmem:[%s391] sm:$0xff]
        %v490 = vsel %vm488, 101, %v489
        %491 = vst [vmem:[%s445] sm:$0xff] %v490
        %s492 = sand.u32 %s194, 1
        %s493 = scalar_lea.sflag [#allocation6], %s492
        %s494 = sand.u32 %s194, 1
        %s495 = smul.addr %s494, 24
        %s496 = scalar_lea.vmem [#allocation10], %s495
        %s497 = sand.u32 %s230, 1
        %s498 = scalar_lea.sflag [#allocation12], %s497
        %s499 = sand.u32 %s230, 1
        %s500 = smul.addr %s499, 8
        %s501 = scalar_lea.vmem [#allocation11], %s500
        // Predicated region
        $region83: #{tpu_custom_call.1} parent=69 // pred_check
          %p502 = pneg %p204
        $region84: #{tpu_custom_call.1} parent=69 // pred_check_branch
          %504 = sbr.rel (%p502) target = $region86
        $region85: #{tpu_custom_call.1} parent=69 // pred_region
          %s505 = sld [smem:[#allocation3]]
          %s506 = sadd.s32 %s505, %s40
          %s507 = sld [smem:[#allocation3 + $0x1]]
          %s508 = sadd.s32 %s507, %s41
          %s510 = ssub.s32 384, 384
          %511 = vsyncadd %s493, %s510
          %s512 = sadd.s32 %s508, %s506
          %s513 = smul.addr %s512, 128
          %s514 = scalar_lea.hbm %s5, %s513
          %s515 = sshll.u32 %s496, 4
          %s516 = int_to_ptr.vmem [resolvable:$true] %s515
          %521 = dma.vmem_to_hbm [thread:$0]  %s516, 384, %s514, %s493, 128, 512, 8
        $region86: #{tpu_custom_call.1} parent=69 // pred_fallthru
          _
        // Predicated region
        $region87: #{tpu_custom_call.1} parent=69 // pred_check
          %p522 = pneg %p240
        $region88: #{tpu_custom_call.1} parent=69 // pred_check_branch
          %524 = sbr.rel (%p522) target = $region90
        $region89: #{tpu_custom_call.1} parent=69 // pred_region
          %s525 = sld [smem:[#allocation3]]
          %s526 = sadd.s32 %s525, %s40
          %s527 = sld [smem:[#allocation3 + $0x1]]
          %s528 = sadd.s32 %s527, %s41
          %s530 = ssub.s32 128, 128
          %531 = vsyncadd %s498, %s530
          %s532 = sadd.s32 %s528, %s526
          %s533 = smul.addr %s532, 128
          %s534 = scalar_lea.hbm %s6, %s533
          %s536 = sshll.u32 %s501, 4
          %s537 = int_to_ptr.vmem [resolvable:$true] %s536
          %539 = dma.vmem_to_hbm [thread:$0]  %s537, 128, %s534, %s498
        $region90: #{tpu_custom_call.1} parent=69 // pred_fallthru
          _
      $region70: #{tpu_custom_call.1} parent=5 // pred_fallthru
        _
      %p540 = scmp.le.s32.totalorder 2, %s31
      // Predicated region
      $region91: #{tpu_custom_call.1} parent=5 // pred_check
        %p541 = pneg %p540
      $region92: #{tpu_custom_call.1} parent=5 // pred_check_branch
        %543 = sbr.rel (%p541) target = $region94
      $region93: #{tpu_custom_call.1} parent=5 // pred_region
        %s544 = ssub.s32 %s31, 2
        // Predicated region
        $region95: #{tpu_custom_call.1} parent=93 // pred_check
          %p545 = pneg %p210
        $region96: #{tpu_custom_call.1} parent=93 // pred_check_branch
          %547 = sbr.rel (%p545) target = $region98
        $region97: #{tpu_custom_call.1} parent=93 // pred_region
          %s548 = sand.u32 %s195, 1
          %s549 = scalar_lea.sflag [#allocation6], %s548
          %s550 = sand.u32 %s195, 1
          %s551 = smul.addr %s550, 24
          %s552 = scalar_lea.vmem [#allocation10], %s551
          %553 = dma.done %s549, 384
        $region98: #{tpu_custom_call.1} parent=93 // pred_fallthru
          _
        // Predicated region
        $region99: #{tpu_custom_call.1} parent=93 // pred_check
          %p554 = pneg %p246
        $region100: #{tpu_custom_call.1} parent=93 // pred_check_branch
          %556 = sbr.rel (%p554) target = $region102
        $region101: #{tpu_custom_call.1} parent=93 // pred_region
          %s557 = sand.u32 %s231, 1
          %s558 = scalar_lea.sflag [#allocation12], %s557
          %s559 = sand.u32 %s231, 1
          %s560 = smul.addr %s559, 8
          %s561 = scalar_lea.vmem [#allocation11], %s560
          %562 = dma.done %s558, 128
        $region102: #{tpu_custom_call.1} parent=93 // pred_fallthru
          _
      $region94: #{tpu_custom_call.1} parent=5 // pred_fallthru
        _
    $region6: #{tpu_custom_call.1} parent=1 // loop_footer
      %s35 = sadd.s32 1, %s31
    $region7: #{tpu_custom_call.1} parent=1 // loop_footer_branch
      %30 = sbr.rel target = $region3
    $region8: #{tpu_custom_call.1} parent=1 // loop_exit
      _
    %563 = vsyncpa [#allocation5], 1
    %s564 = scalar_lea.sflag [#allocation5], 1
    %565 = vsyncpa %s564, 1
    %566 = vsyncpa [#allocation8], 1
    %s567 = scalar_lea.sflag [#allocation8], 1
    %568 = vsyncpa %s567, 1
    %569 = vsyncpa [#allocation6], 1
    %s570 = scalar_lea.sflag [#allocation6], 1
    %571 = vsyncpa %s570, 1
    %572 = vsyncpa [#allocation12], 1
    %s573 = scalar_lea.sflag [#allocation12], 1
    %574 = vsyncpa %s573, 1

</llo_original>
